<compile_context>
chip_gen: v7x
topology: tpu7x:2x2x1
jax: 0.10.0
libtpu: 0.0.40
codegen_flags: <defaults>
</compile_context>

<pallas_src>
import functools

import jax
import jax.numpy as jnp
from jax.experimental import pallas as pl
from jax.experimental.pallas import tpu as pltpu

_SUBLANE = 8


def _round_up(n, m):
    return ((n + m - 1) // m) * m


def _cdiv(a, b):
    return -(-a // b)


def mymodel_kernel(x_ref, wdec_ref, wfc_ref, bfc_ref, probs_ref, xap_ref):
    # Decoder: xap = x @ W_dec^T   (weight pre-transposed to [J, im_size])
    xap = jnp.dot(x_ref[...], wdec_ref[...], preferred_element_type=jnp.float32)

    # FC: logits = xap @ W_fc^T + b  (weight pre-transposed to [im_size, nc];
    # dropouth p=0.25 is identity in eval mode)
    logits = jnp.dot(xap, wfc_ref[...], preferred_element_type=jnp.float32)
    logits = logits + bfc_ref[...]

    # Numerically-stable softmax along the class axis (true width, no padding).
    m = jnp.max(logits, axis=1, keepdims=True)
    e = jnp.exp(logits - m)
    denom = jnp.sum(e, axis=1, keepdims=True)
    probs = e / denom

    probs_ref[...] = probs.astype(probs_ref.dtype)
    xap_ref[...] = xap.astype(xap_ref.dtype)


def prepare_params(w_dec, w_fc, b_fc):
    """One-time (init-time) parameter prep — NOT in the per-call hot path.

    Pre-transposes the PyTorch-layout weights so both in-kernel matmuls are
    native [M,K]@[K,N]:
      decoder.weight [im_size, J]        -> [J, im_size]
      FC.weight      [num_classes, im_size] -> [im_size, num_classes]
      FC.bias        [num_classes]       -> [1, num_classes]
    """
    im_size, J = w_dec.shape
    num_classes, _ = w_fc.shape
    w_dec_t = jnp.asarray(w_dec, jnp.float32).T                 # [J, im_size]
    w_fc_t = jnp.asarray(w_fc, jnp.float32).T                   # [im_size, nc]
    b_fc_2d = jnp.asarray(b_fc, jnp.float32).reshape(1, num_classes)
    return (w_dec_t, w_fc_t, b_fc_2d), (int(J), int(im_size), int(num_classes))


@functools.partial(jax.jit, static_argnames=("dims", "block_b"))
def mymodel_forward(x, params, dims, block_b=2048):
    """x: [B, J, 1, 1]; params/dims from prepare_params.
    Returns (probs [B, num_classes], xap [B, im_size])."""
    w_dec_t, w_fc_t, b_fc = params
    J, im_size, num_classes = dims

    # Module does x.squeeze(); explicit reshape keeps the batch dim when B==1.
    B = x.shape[0]
    x2d = x.reshape(B, J).astype(jnp.float32)

    # Batch tiling: evenly-sized tiles (no mostly-padding last tile), >= 2 grid
    # steps when B allows so v7x can shard the batch across both TensorCores.
    B8 = _round_up(B, _SUBLANE)
    n_steps = max(_cdiv(B8, block_b), 2 if B8 >= 2 * _SUBLANE else 1)
    bb = _round_up(_cdiv(B8, n_steps), _SUBLANE)
    b_pad = bb * n_steps
    if b_pad != B:
        x2d = jnp.pad(x2d, ((0, b_pad - B), (0, 0)))

    probs_p, xap_p = pl.pallas_call(
        mymodel_kernel,
        out_shape=(
            jax.ShapeDtypeStruct((b_pad, num_classes), jnp.float32),
            jax.ShapeDtypeStruct((b_pad, im_size), jnp.float32),
        ),
        grid=(n_steps,),
        in_specs=[
            pl.BlockSpec((bb, J), lambda i: (i, 0)),              # x row tile
            pl.BlockSpec((J, im_size), lambda i: (0, 0)),         # W_dec^T (resident)
            pl.BlockSpec((im_size, num_classes), lambda i: (0, 0)),  # W_fc^T (resident)
            pl.BlockSpec((1, num_classes), lambda i: (0, 0)),     # bias (resident)
        ],
        out_specs=(
            pl.BlockSpec((bb, num_classes), lambda i: (i, 0)),    # probs, true width
            pl.BlockSpec((bb, im_size), lambda i: (i, 0)),        # xap, true width
        ),
        compiler_params=pltpu.CompilerParams(
            dimension_semantics=("parallel",)),                   # v7x: 2 TCs share batch
    )(x2d, w_dec_t, w_fc_t, b_fc)

    # Strip batch padding only (no lane padding to strip anymore).
    if b_pad != B:
        return probs_p[:B], xap_p[:B]
    return probs_p, xap_p


if __name__ == "__main__":
    # Small shapes consistent with the module: J=32, im_size=64, num_classes=16
    B, J, IM, NC = 8, 32, 64, 16

    key = jax.random.PRNGKey(0)
    kx, kd, kf, kb = jax.random.split(key, 4)

    # Synthetic NCHW-ish input that "squeezes" to [B, J]
    x = jax.random.normal(kx, (B, J, 1, 1), dtype=jnp.float32)

    # PyTorch-layout parameters (uniform, fan-in-like scaling)
    w_dec = jax.random.uniform(kd, (IM, J), jnp.float32,
                               minval=-1.0 / jnp.sqrt(J), maxval=1.0 / jnp.sqrt(J))
    w_fc = jax.random.uniform(kf, (NC, IM), jnp.float32,
                              minval=-1.0 / jnp.sqrt(IM), maxval=1.0 / jnp.sqrt(IM))
    b_fc = jax.random.uniform(kb, (NC,), jnp.float32,
                              minval=-1.0 / jnp.sqrt(IM), maxval=1.0 / jnp.sqrt(IM))

    # Init-time prep (transpose / layout) — outside the hot path.
    params, dims = prepare_params(w_dec, w_fc, b_fc)

    # Pure-JAX reference
    def reference(xin):
        x2d = xin.reshape(xin.shape[0], J)
        xap_r = x2d @ w_dec.T
        logits_r = xap_r @ w_fc.T + b_fc
        return jax.nn.softmax(logits_r, axis=1), xap_r

    # --- B = 8 (single grid step) ---
    probs, xap = mymodel_forward(x, params, dims)
    jax.block_until_ready((probs, xap))
    probs_ref, xap_ref = reference(x)
    assert probs.shape == (B, NC) and xap.shape == (B, IM)
    assert jnp.allclose(xap, xap_ref, atol=1e-5), "xap mismatch"
    assert jnp.allclose(probs, probs_ref, atol=1e-5, rtol=1e-5), "probs mismatch"

    # --- B = 1 (squeeze would have dropped the batch dim; reshape keeps it) ---
    x1 = x[:1]
    probs1, xap1 = mymodel_forward(x1, params, dims)
    jax.block_until_ready((probs1, xap1))
    assert probs1.shape == (1, NC) and xap1.shape == (1, IM)
    assert jnp.allclose(xap1, xap_ref[:1], atol=1e-5)
    assert jnp.allclose(probs1, probs_ref[:1], atol=1e-5, rtol=1e-5)

    # --- Multi-step grid path (ragged batch, forced small block_b) ---
    Bm = 300
    xm = jax.random.normal(jax.random.PRNGKey(1), (Bm, J, 1, 1), dtype=jnp.float32)
    probsm, xapm = mymodel_forward(xm, params, dims, block_b=128)
    jax.block_until_ready((probsm, xapm))
    probsm_ref, xapm_ref = reference(xm)
    assert probsm.shape == (Bm, NC) and xapm.shape == (Bm, IM)
    assert jnp.allclose(xapm, xapm_ref, atol=1e-5), "multi-step xap mismatch"
    assert jnp.allclose(probsm, probsm_ref, atol=1e-5, rtol=1e-5), "multi-step probs mismatch"

    print("KERNEL_OK")
</pallas_src>

<mosaic_0001>
module attributes {stable_mosaic.version = 11 : i64} {
  func.func @mymodel_kernel(%arg0: i32, %arg1: memref<8x32xf32, #tpu.memory_space<vmem>>, %arg2: memref<32x64xf32, #tpu.memory_space<vmem>>, %arg3: memref<64x16xf32, #tpu.memory_space<vmem>>, %arg4: memref<1x16xf32, #tpu.memory_space<vmem>>, %arg5: memref<8x16xf32, #tpu.memory_space<vmem>>, %arg6: memref<8x64xf32, #tpu.memory_space<vmem>>) attributes {dimension_semantics = [#tpu.dimension_semantics<parallel>], iteration_bounds = array<i64: 1>, scalar_prefetch = 0 : i64, scratch_operands = 0 : i64, tpu.core_type = #tpu.core_type<tc>, window_params = [{transform_indices = @transform_0, window_bounds = array<i64: 8, 32>}, {pipeline_mode = #tpu.pipeline_mode<synchronous>, transform_indices = @transform_1, window_bounds = array<i64: 32, 64>}, {pipeline_mode = #tpu.pipeline_mode<synchronous>, transform_indices = @transform_2, window_bounds = array<i64: 64, 16>}, {pipeline_mode = #tpu.pipeline_mode<synchronous>, transform_indices = @transform_3, window_bounds = array<i64: 1, 16>}, {transform_indices = @transform_4, window_bounds = array<i64: 8, 16>}, {transform_indices = @transform_5, window_bounds = array<i64: 8, 64>}]} {
    %c0 = arith.constant 0 : index
    %c0_0 = arith.constant 0 : index
    %0 = vector.load %arg1[%c0, %c0_0] : memref<8x32xf32, #tpu.memory_space<vmem>>, vector<8x32xf32>
    %c0_1 = arith.constant 0 : index
    %c0_2 = arith.constant 0 : index
    %1 = vector.load %arg2[%c0_1, %c0_2] : memref<32x64xf32, #tpu.memory_space<vmem>>, vector<32x64xf32>
    %cst = arith.constant dense<0.000000e+00> : vector<8x64xf32>
    %2 = tpu.matmul %0, %1, %cst {dimension_numbers = #tpu.dot_dimension_numbers<[1], [0], [0], [1], [0, 0, 1, 1], [], []>} : vector<8x32xf32>, vector<32x64xf32>, vector<8x64xf32> -> vector<8x64xf32>
    %c0_3 = arith.constant 0 : index
    %c0_4 = arith.constant 0 : index
    %3 = vector.load %arg3[%c0_3, %c0_4] : memref<64x16xf32, #tpu.memory_space<vmem>>, vector<64x16xf32>
    %cst_5 = arith.constant dense<0.000000e+00> : vector<8x16xf32>
    %4 = tpu.matmul %2, %3, %cst_5 {dimension_numbers = #tpu.dot_dimension_numbers<[1], [0], [0], [1], [0, 0, 1, 1], [], []>} : vector<8x64xf32>, vector<64x16xf32>, vector<8x16xf32> -> vector<8x16xf32>
    %c0_6 = arith.constant 0 : index
    %c0_7 = arith.constant 0 : index
    %5 = vector.load %arg4[%c0_6, %c0_7] : memref<1x16xf32, #tpu.memory_space<vmem>>, vector<1x16xf32>
    %6 = vector.broadcast %5 : vector<1x16xf32> to vector<8x16xf32>
    %7 = arith.addf %4, %6 : vector<8x16xf32>
    %cst_8 = arith.constant dense<0xFF800000> : vector<8xf32>
    %8 = vector.multi_reduction <maximumf>, %7, %cst_8 [1] : vector<8x16xf32> to vector<8xf32>
    %9 = vector.shape_cast %8 : vector<8xf32> to vector<8x1xf32>
    %10 = vector.broadcast %9 : vector<8x1xf32> to vector<8x16xf32>
    %11 = arith.subf %7, %10 : vector<8x16xf32>
    %12 = math.exp %11 : vector<8x16xf32>
    %cst_9 = arith.constant dense<0.000000e+00> : vector<8xf32>
    %13 = vector.multi_reduction <add>, %12, %cst_9 [1] : vector<8x16xf32> to vector<8xf32>
    %14 = vector.shape_cast %13 : vector<8xf32> to vector<8x1xf32>
    %15 = vector.broadcast %14 : vector<8x1xf32> to vector<8x16xf32>
    %16 = arith.divf %12, %15 : vector<8x16xf32>
    %c0_10 = arith.constant 0 : index
    %c0_11 = arith.constant 0 : index
    %17 = vector.load %arg5[%c0_10, %c0_11] : memref<8x16xf32, #tpu.memory_space<vmem>>, vector<8x16xf32>
    tpu.vector_store %arg5[%c0_10, %c0_11], %16 {strides = array<i32>} : memref<8x16xf32, #tpu.memory_space<vmem>>, vector<8x16xf32>,
    %c0_12 = arith.constant 0 : index
    %c0_13 = arith.constant 0 : index
    %18 = vector.load %arg6[%c0_12, %c0_13] : memref<8x64xf32, #tpu.memory_space<vmem>>, vector<8x64xf32>
    tpu.vector_store %arg6[%c0_12, %c0_13], %2 {strides = array<i32>} : memref<8x64xf32, #tpu.memory_space<vmem>>, vector<8x64xf32>,
    return
  }
  func.func @transform_0(%arg0: i32) -> (i32, i32) {
    %c0_i32 = arith.constant 0 : i32
    %c0_i32_0 = arith.constant 0 : i32
    return %arg0, %c0_i32 : i32, i32
  }
  func.func @transform_1(%arg0: i32) -> (i32, i32) {
    %c0_i32 = arith.constant 0 : i32
    %c0_i32_0 = arith.constant 0 : i32
    %c0_i32_1 = arith.constant 0 : i32
    return %c0_i32, %c0_i32_0 : i32, i32
  }
  func.func @transform_2(%arg0: i32) -> (i32, i32) {
    %c0_i32 = arith.constant 0 : i32
    %c0_i32_0 = arith.constant 0 : i32
    %c0_i32_1 = arith.constant 0 : i32
    return %c0_i32, %c0_i32_0 : i32, i32
  }
  func.func @transform_3(%arg0: i32) -> (i32, i32) {
    %c0_i32 = arith.constant 0 : i32
    %c0_i32_0 = arith.constant 0 : i32
    %c0_i32_1 = arith.constant 0 : i32
    return %c0_i32, %c0_i32_0 : i32, i32
  }
  func.func @transform_4(%arg0: i32) -> (i32, i32) {
    %c0_i32 = arith.constant 0 : i32
    %c0_i32_0 = arith.constant 0 : i32
    return %arg0, %c0_i32 : i32, i32
  }
  func.func @transform_5(%arg0: i32) -> (i32, i32) {
    %c0_i32 = arith.constant 0 : i32
    %c0_i32_0 = arith.constant 0 : i32
    return %arg0, %c0_i32 : i32, i32
  }
}

</mosaic_0001>

<llo_original>
// kernel: mymodel_forward.1
$region0: #{mymodel_forward.1}
  #allocation0 [shape = 'u32[]', space=smem, size = 0x4, offset = 0x4, fixed_abs, tag = 'smem constant byte address 0x4 - core index']
  #allocation1 [shape = 'u32[144,128]{1,0:T(1,128)}', space=vmem, size = 0x12000, scoped, tag = 'internal scratch']
  %s0 = inlined_call_operand.vmem [shape: f32[8,32], index: 0, kind: input, shape index: {}]
  %s1 = inlined_call_operand.vmem [shape: f32[32,64], index: 1, kind: input, shape index: {}]
  %s2 = inlined_call_operand.vmem [shape: f32[64,16], index: 2, kind: input, shape index: {}]
  %s3 = inlined_call_operand.vmem [shape: f32[1,16], index: 3, kind: input, shape index: {}]
  %s4 = inlined_call_operand.hbm [shape: f32[8,16], index: 4, kind: output, shape index: {0}]
  %s5 = inlined_call_operand.hbm [shape: f32[8,64], index: 5, kind: output, shape index: {1}]
  %6 = xla_tuple %s4, %s5
  %s7 = sld [smem:[#allocation0]]
  $region34: #{mymodel_forward.1} parent=0
    _
  %s9 = ssub.s32 1, %s7
  %s10 = scalar_select 0, %s9, %s7
  $region1: #{mymodel_forward.1} parent=0
    #allocation2 [shape = 'u8[4096]{0}', space=vmem, size = 0x1000, scoped, tag = 'output window, operand 0, single buffered']
    #allocation3 [shape = 's32[1]{0}', space=sflag, size = 0x4, scoped, tag = 'scoped memory for mymodel_forward.1']
    #allocation4 [shape = 'u8[4096]{0}', space=vmem, size = 0x1000, scoped, tag = 'output window, operand 1, single buffered']
    #allocation5 [shape = 's32[1]{0}', space=sflag, size = 0x4, scoped, tag = 'scoped memory for mymodel_forward.1']
    %11 = vsyncpa [#allocation3], 0
    %12 = vsyncpa [#allocation5], 0
    // Predicated region
    $region2: #{mymodel_forward.1} parent=1 // pred_check
      _
    $region3: #{mymodel_forward.1} parent=1 // pred_check_branch
      %14 = sbr.rel (0) target = $region5
    $region4: #{mymodel_forward.1} parent=1 // pred_region
      _
    $region5: #{mymodel_forward.1} parent=1 // pred_fallthru
      _
    // Predicated region
    $region6: #{mymodel_forward.1} parent=1 // pred_check
      _
    $region7: #{mymodel_forward.1} parent=1 // pred_check_branch
      %16 = sbr.rel (0) target = $region9
    $region8: #{mymodel_forward.1} parent=1 // pred_region
      _
    $region9: #{mymodel_forward.1} parent=1 // pred_fallthru
      _
    // Predicated region
    $region10: #{mymodel_forward.1} parent=1 // pred_check
      _
    $region11: #{mymodel_forward.1} parent=1 // pred_check_branch
      %18 = sbr.rel (0) target = $region13
    $region12: #{mymodel_forward.1} parent=1 // pred_region
      _
    $region13: #{mymodel_forward.1} parent=1 // pred_fallthru
      _
    // Predicated region
    $region14: #{mymodel_forward.1} parent=1 // pred_check
      _
    $region15: #{mymodel_forward.1} parent=1 // pred_check_branch
      %20 = sbr.rel (0) target = $region17
    $region16: #{mymodel_forward.1} parent=1 // pred_region
      _
    $region17: #{mymodel_forward.1} parent=1 // pred_fallthru
      _
    %v21 = vld [vmem:[%s0] sm:$0xff]
    %v22 = vld [vmem:[%s1] sm:$0xff]
    %v23 = vld [vmem:[%s1 + $0x8] sm:$0xff]
    %v24 = vld [vmem:[%s1 + $0x10] sm:$0xff]
    %v25 = vld [vmem:[%s1 + $0x18] sm:$0xff]
    %vm26 = vcmask 261120
    %v28 = vsel %vm26, %v21, 0
    %30 = vmatprep.subr.mxu0 0.0
    %31 = vmatpush1.msra.mxu0 %v22
    %32 = vmatprep.subr.mxu0 0.0
    %33 = vmatpush1.msra.mxu0 %v23
    %34 = vmatprep.subr.mxu0 0.0
    %35 = vmatpush1.msra.mxu0 %v24
    %36 = vmatprep.subr.mxu0 0.0
    %37 = vmatpush1.msra.mxu0 %v25
    %38 = vmatprep.subr.mxu0 0.0
    %39 = vmatpush1.msra.mxu0 0.0
    %40 = vmatprep.subr.mxu0 0.0
    %41 = vmatpush1.msra.mxu0 0.0
    %42 = vmatprep.subr.mxu0 0.0
    %43 = vmatpush1.msra.mxu0 0.0
    %44 = vmatprep.subr.mxu0 0.0
    %45 = vmatpush1.msra.mxu0 0.0
    %46 = vmatprep.subr.mxu0 0.0
    %47 = vmatpush1.msra.mxu0 0.0
    %48 = vmatprep.subr.mxu0 0.0
    %49 = vmatpush1.msra.mxu0 0.0
    %50 = vmatprep.subr.mxu0 0.0
    %51 = vmatpush1.msra.mxu0 0.0
    %52 = vmatprep.subr.mxu0 0.0
    %53 = vmatpush1.msra.mxu0 0.0
    %54 = vmatprep.subr.mxu0 0.0
    %55 = vmatpush1.msra.mxu0 0.0
    %56 = vmatprep.subr.mxu0 0.0
    %57 = vmatpush1.msra.mxu0 0.0
    %58 = vmatprep.subr.mxu0 0.0
    %59 = vmatpush1.msra.mxu0 0.0
    %60 = vmatprep.subr.mxu0 0.0
    %61 = vmatpush1.msra.mxu0 0.0
    %62 = vmatprep.subr.mxu0 0.0
    %63 = vmatpush1.msra.mxu0 0.0
    %64 = vmatprep.subr.mxu0 0.0
    %65 = vmatpush1.msra.mxu0 0.0
    %66 = vmatprep.subr.mxu0 0.0
    %67 = vmatpush1.msra.mxu0 0.0
    %68 = vmatprep.subr.mxu0 0.0
    %69 = vmatpush1.msra.mxu0 0.0
    %70 = vmatprep.subr.mxu0 0.0
    %71 = vmatpush1.msra.mxu0 0.0
    %72 = vmatprep.subr.mxu0 0.0
    %73 = vmatpush1.msra.mxu0 0.0
    %74 = vmatprep.subr.mxu0 0.0
    %75 = vmatpush1.msra.mxu0 0.0
    %76 = vmatprep.subr.mxu0 0.0
    %77 = vmatpush1.msra.mxu0 0.0
    %78 = vmatprep.subr.mxu0 0.0
    %79 = vmatpush1.msra.mxu0 0.0
    %80 = vmatprep.subr.mxu0 0.0
    %81 = vmatpush1.msra.mxu0 0.0
    %82 = vmatprep.subr.mxu0 0.0
    %83 = vmatpush1.msra.mxu0 0.0
    %84 = vmatprep.subr.mxu0 0.0
    %85 = vmatpush1.msra.mxu0 0.0
    %86 = vmatprep.subr.mxu0 0.0
    %87 = vmatpush1.msra.mxu0 0.0
    %88 = vmatprep.subr.mxu0 0.0
    %89 = vmatpush1.msra.mxu0 0.0
    %90 = vmatprep.subr.mxu0 0.0
    %91 = vmatpush1.msra.mxu0 0.0
    %92 = vmatprep.subr.mxu0 0.0
    %93 = vmatpush1.msra.mxu0 0.0
    %94 = vmatprep.mubr.f32.mxu0 0.0
    %95 = vmatmul.mubr.f32.gmra.mrb[0].mxu0 %v28
    %v96 = vpop.f32.mrb[0].mxu0
    %v97 = vadd.f32 0.0, %v96
    %v98 = vpop.f32.mrb[0].mxu0
    %99 = vdwg.mxu0
    %v100 = vld [vmem:[%s2] sm:$0xff]
    %v101 = vld [vmem:[%s2 + $0x8] sm:$0xff]
    %v102 = vld [vmem:[%s2 + $0x10] sm:$0xff]
    %v103 = vld [vmem:[%s2 + $0x18] sm:$0xff]
    %v104 = vld [vmem:[%s2 + $0x20] sm:$0xff]
    %v105 = vld [vmem:[%s2 + $0x28] sm:$0xff]
    %v106 = vld [vmem:[%s2 + $0x30] sm:$0xff]
    %v107 = vld [vmem:[%s2 + $0x38] sm:$0xff]
    %v108 = vld [vmem:[%s3] sm:$0x1]
    %v110 = vlaneseq
    %v111 = vshrl.u32 %v110, 7
    %v112 = vsub.s32 0, %v111
    %v113 = vrot.slane %v108, %v112
    %vm115 = vcmask 523264
    %v117 = vsel %vm115, %v97, 0
    %119 = vmatprep.subr.mxu0 0.0
    %120 = vmatpush1.msra.mxu0 %v100
    %121 = vmatprep.subr.mxu0 0.0
    %122 = vmatpush1.msra.mxu0 %v101
    %123 = vmatprep.subr.mxu0 0.0
    %124 = vmatpush1.msra.mxu0 %v102
    %125 = vmatprep.subr.mxu0 0.0
    %126 = vmatpush1.msra.mxu0 %v103
    %127 = vmatprep.subr.mxu0 0.0
    %128 = vmatpush1.msra.mxu0 %v104
    %129 = vmatprep.subr.mxu0 0.0
    %130 = vmatpush1.msra.mxu0 %v105
    %131 = vmatprep.subr.mxu0 0.0
    %132 = vmatpush1.msra.mxu0 %v106
    %133 = vmatprep.subr.mxu0 0.0
    %134 = vmatpush1.msra.mxu0 %v107
    %135 = vmatprep.subr.mxu0 0.0
    %136 = vmatpush1.msra.mxu0 0.0
    %137 = vmatprep.subr.mxu0 0.0
    %138 = vmatpush1.msra.mxu0 0.0
    %139 = vmatprep.subr.mxu0 0.0
    %140 = vmatpush1.msra.mxu0 0.0
    %141 = vmatprep.subr.mxu0 0.0
    %142 = vmatpush1.msra.mxu0 0.0
    %143 = vmatprep.subr.mxu0 0.0
    %144 = vmatpush1.msra.mxu0 0.0
    %145 = vmatprep.subr.mxu0 0.0
    %146 = vmatpush1.msra.mxu0 0.0
    %147 = vmatprep.subr.mxu0 0.0
    %148 = vmatpush1.msra.mxu0 0.0
    %149 = vmatprep.subr.mxu0 0.0
    %150 = vmatpush1.msra.mxu0 0.0
    %151 = vmatprep.subr.mxu0 0.0
    %152 = vmatpush1.msra.mxu0 0.0
    %153 = vmatprep.subr.mxu0 0.0
    %154 = vmatpush1.msra.mxu0 0.0
    %155 = vmatprep.subr.mxu0 0.0
    %156 = vmatpush1.msra.mxu0 0.0
    %157 = vmatprep.subr.mxu0 0.0
    %158 = vmatpush1.msra.mxu0 0.0
    %159 = vmatprep.subr.mxu0 0.0
    %160 = vmatpush1.msra.mxu0 0.0
    %161 = vmatprep.subr.mxu0 0.0
    %162 = vmatpush1.msra.mxu0 0.0
    %163 = vmatprep.subr.mxu0 0.0
    %164 = vmatpush1.msra.mxu0 0.0
    %165 = vmatprep.subr.mxu0 0.0
    %166 = vmatpush1.msra.mxu0 0.0
    %167 = vmatprep.subr.mxu0 0.0
    %168 = vmatpush1.msra.mxu0 0.0
    %169 = vmatprep.subr.mxu0 0.0
    %170 = vmatpush1.msra.mxu0 0.0
    %171 = vmatprep.subr.mxu0 0.0
    %172 = vmatpush1.msra.mxu0 0.0
    %173 = vmatprep.subr.mxu0 0.0
    %174 = vmatpush1.msra.mxu0 0.0
    %175 = vmatprep.subr.mxu0 0.0
    %176 = vmatpush1.msra.mxu0 0.0
    %177 = vmatprep.subr.mxu0 0.0
    %178 = vmatpush1.msra.mxu0 0.0
    %179 = vmatprep.subr.mxu0 0.0
    %180 = vmatpush1.msra.mxu0 0.0
    %181 = vmatprep.subr.mxu0 0.0
    %182 = vmatpush1.msra.mxu0 0.0
    %183 = vmatprep.mubr.f32.mxu0 0.0
    %184 = vmatmul.mubr.f32.gmra.mrb[0].mxu0 %v117
    %v185 = vpop.f32.mrb[0].mxu0
    %v186 = vadd.f32 %v113, %v185
    %v187 = vpop.f32.mrb[0].mxu0
    %188 = vdwg.mxu0
    %vm189 = vcmask 130048
    %v190 = vsel %vm189, %v186, -inf
    %191 = vmax.xlane.f32.xlu0 %v190
    %v192 = vpop.xlane.xlu0 %191
    %v193 = vsub.f32 %v186, %v192
    %v194 = vmul.f32 %v193, 1.442695
    %v195 = vpow.pop %v194
    %v196 = vsel %vm189, %v195, 0.0
    %197 = vadd.xlane.f32.xlu0 %v196
    %v198 = vpop.xlane.xlu0 %197
    %v199 = vrcp.pop %v198
    %v200 = vmul.f32 %v195, %v199
    %201 = vst.msk [vmem:[#allocation2] sm:$0xff] %vm189, %v200
    %202 = vst.msk [vmem:[#allocation4] sm:$0xff] %vm115, %v97
    // Predicated region
    $region18: #{mymodel_forward.1} parent=1 // pred_check
      _
    $region19: #{mymodel_forward.1} parent=1 // pred_check_branch
      %204 = sbr.rel (0) target = $region21
    $region20: #{mymodel_forward.1} parent=1 // pred_region
      %s206 = ssub.s32 128, 128
      %207 = vsyncadd [#allocation3], %s206
      %s209 = sshll.u32 [#allocation2], 4
      %s210 = int_to_ptr.vmem [resolvable:$true] %s209
      %212 = dma.vmem_to_hbm [thread:$0]  %s210, 128, %s4, [#allocation3]
    $region21: #{mymodel_forward.1} parent=1 // pred_fallthru
      _
    // Predicated region
    $region22: #{mymodel_forward.1} parent=1 // pred_check
      _
    $region23: #{mymodel_forward.1} parent=1 // pred_check_branch
      %214 = sbr.rel (0) target = $region25
    $region24: #{mymodel_forward.1} parent=1 // pred_region
      %s216 = ssub.s32 128, 128
      %217 = vsyncadd [#allocation5], %s216
      %s219 = sshll.u32 [#allocation4], 4
      %s220 = int_to_ptr.vmem [resolvable:$true] %s219
      %222 = dma.vmem_to_hbm [thread:$0]  %s220, 128, %s5, [#allocation5]
    $region25: #{mymodel_forward.1} parent=1 // pred_fallthru
      _
    // Predicated region
    $region26: #{mymodel_forward.1} parent=1 // pred_check
      _
    $region27: #{mymodel_forward.1} parent=1 // pred_check_branch
      %224 = sbr.rel (0) target = $region29
    $region28: #{mymodel_forward.1} parent=1 // pred_region
      %225 = dma.done [#allocation3], 128
    $region29: #{mymodel_forward.1} parent=1 // pred_fallthru
      _
    // Predicated region
    $region30: #{mymodel_forward.1} parent=1 // pred_check
      _
    $region31: #{mymodel_forward.1} parent=1 // pred_check_branch
      %227 = sbr.rel (0) target = $region33
    $region32: #{mymodel_forward.1} parent=1 // pred_region
      %228 = dma.done [#allocation5], 128
    $region33: #{mymodel_forward.1} parent=1 // pred_fallthru
      _
    %229 = vsyncpa [#allocation3], 1
    %230 = vsyncpa [#allocation5], 1

</llo_original>
